<compile_context>
chip_gen: v5e
topology: v5e:2x2
jax: 0.10.0
libtpu: 0.0.40
codegen_flags: <defaults>
</compile_context>

<pallas_src>
import jax
import jax.numpy as jnp
from jax.experimental import pallas as pl
from jax.experimental.pallas import tpu as pltpu

LANE = 128      # batch lives on the lane axis inside the kernel
SUBLANE = 8     # feature dims padded to sublane granule only


def _round_up(n, m):
    return ((n + m - 1) // m) * m


def mlp_kernel(x_ref,
               w1_ref, b1_ref,
               w2_ref, b2_ref,
               w3_ref, b3_ref,
               w4_ref, b4_ref,
               w5_ref, b5_ref,
               o_ref):
    """Feature-major MLP: every tensor is (features, batch_tile).

    h_{l+1} = relu(W_l^T @ h_l + b_l); MXU accumulation in f32, bias-add and
    ReLU in f32, MXU operands in the weights' dtype (bf16 fast / f32 exact).
    """
    cdt = w1_ref.dtype

    h = jnp.dot(w1_ref[...], x_ref[...], preferred_element_type=jnp.float32)
    h = jnp.maximum(h + b1_ref[...], 0.0)

    h = jnp.dot(w2_ref[...], h.astype(cdt), preferred_element_type=jnp.float32)
    h = jnp.maximum(h + b2_ref[...], 0.0)

    h = jnp.dot(w3_ref[...], h.astype(cdt), preferred_element_type=jnp.float32)
    h = jnp.maximum(h + b3_ref[...], 0.0)

    h = jnp.dot(w4_ref[...], h.astype(cdt), preferred_element_type=jnp.float32)
    h = jnp.maximum(h + b4_ref[...], 0.0)

    h = jnp.dot(w5_ref[...], h.astype(cdt), preferred_element_type=jnp.float32)
    o_ref[...] = (h + b5_ref[...]).astype(o_ref.dtype)


def net_forward(x, params, *, compute_dtype=jnp.bfloat16, tile_b=8192):
    """params: list of (w, b) with w shaped (in, out), b shaped (1, out)."""
    B, d_in = x.shape
    out_dim = params[-1][0].shape[1]

    # --- feature-major weights (d_out_p, d_in_p); biases (d_out_p, 1) ---
    d_in_p = _round_up(d_in, SUBLANE)
    padded_params = []
    prev_p = d_in_p
    for w, b in params:
        w_in, d_out = w.shape
        d_out_p = _round_up(d_out, SUBLANE)
        wt = jnp.zeros((d_out_p, prev_p), compute_dtype)
        wt = wt.at[:d_out, :w_in].set(w.T.astype(compute_dtype))
        bt = jnp.zeros((d_out_p, 1), jnp.float32)
        bt = bt.at[:d_out, 0].set(b.reshape(-1).astype(jnp.float32))
        padded_params.append((wt, bt))
        prev_p = d_out_p
    out_p = prev_p

    # --- batch (lane) tiling: even multi-tile grid so v7x's 2 TCs both work ---
    if B >= 2 * tile_b:
        tile = tile_b
    elif B >= 2 * LANE:
        tile = min(tile_b, _round_up((B + 1) // 2, LANE))
    else:
        tile = LANE
    B_p = _round_up(B, tile)

    # x -> feature-major (d_in_p, B_p), streamed per batch tile in compute dtype.
    x_t = jnp.pad(x.T.astype(compute_dtype),
                  ((0, d_in_p - d_in), (0, B_p - B)))

    flat_args = [x_t]
    in_specs = [pl.BlockSpec((d_in_p, tile), lambda i: (0, i))]
    for wt, bt in padded_params:
        flat_args.extend([wt, bt])
        # weights/biases resident in VMEM across all grid steps
        in_specs.append(pl.BlockSpec(wt.shape, lambda i: (0, 0)))
        in_specs.append(pl.BlockSpec(bt.shape, lambda i: (0, 0)))

    out_t = pl.pallas_call(
        mlp_kernel,
        out_shape=jax.ShapeDtypeStruct((out_p, B_p), jnp.float32),
        grid=(B_p // tile,),
        in_specs=in_specs,
        out_specs=pl.BlockSpec((out_p, tile), lambda i: (0, i)),
        compiler_params=pltpu.CompilerParams(
            dimension_semantics=("parallel",),   # 2 TCs on v7x; no-op on v5e/v6e
        ),
    )(*flat_args)

    # back to (B, 3) row-major
    return out_t[:out_dim, :B].T


def init_params(key, input_dim, hidden):
    """Deterministic init mirroring nn.Linear shapes (out, in) -> stored as (in, out)."""
    dims = [(input_dim, hidden), (hidden, hidden), (hidden, hidden),
            (hidden, hidden), (hidden, 3)]
    params = []
    for i, (d_in, d_out) in enumerate(dims):
        kw, kb = jax.random.split(jax.random.fold_in(key, i))
        bound = 1.0 / jnp.sqrt(d_in)
        # PyTorch nn.Linear default: U(-1/sqrt(in), 1/sqrt(in)) for weight and bias.
        w = jax.random.uniform(kw, (d_in, d_out), jnp.float32, -bound, bound)
        b = jax.random.uniform(kb, (1, d_out), jnp.float32, -bound, bound)
        params.append((w, b))
    return params


def reference_forward(x, params):
    h = x
    for i, (w, b) in enumerate(params):
        h = h @ w + b
        if i < len(params) - 1:
            h = jnp.maximum(h, 0.0)
    return h


if __name__ == "__main__":
    key = jax.random.PRNGKey(0)
    batch, input_dim, hidden = 8, 16, 32

    kx, kp = jax.random.split(key)
    x = jax.random.normal(kx, (batch, input_dim), jnp.float32)
    params = init_params(kp, input_dim, hidden)

    ref = reference_forward(x, params)

    # Exact path (f32 MXU operands): must match the plain-JAX reference tightly.
    out_f32 = jax.block_until_ready(
        net_forward(x, params, compute_dtype=jnp.float32))
    assert out_f32.shape == (batch, 3), out_f32.shape
    assert jnp.allclose(out_f32, ref, atol=1e-4, rtol=1e-4), "f32 mismatch vs reference"

    # Fast path (bf16 MXU operands, f32 accumulation): looser tolerance.
    out_bf16 = jax.block_until_ready(
        net_forward(x, params, compute_dtype=jnp.bfloat16))
    assert out_bf16.shape == (batch, 3), out_bf16.shape
    assert jnp.allclose(out_bf16, ref, atol=1e-1, rtol=1e-1), "bf16 mismatch vs reference"

    print("KERNEL_OK")
</pallas_src>

<mosaic_0001>
module attributes {stable_mosaic.version = 11 : i64} {
  func.func @mlp_kernel(%arg0: i32, %arg1: memref<16x128xf32, #tpu.memory_space<vmem>>, %arg2: memref<32x16xf32, #tpu.memory_space<vmem>>, %arg3: memref<32x1xf32, #tpu.memory_space<vmem>>, %arg4: memref<32x32xf32, #tpu.memory_space<vmem>>, %arg5: memref<32x1xf32, #tpu.memory_space<vmem>>, %arg6: memref<32x32xf32, #tpu.memory_space<vmem>>, %arg7: memref<32x1xf32, #tpu.memory_space<vmem>>, %arg8: memref<32x32xf32, #tpu.memory_space<vmem>>, %arg9: memref<32x1xf32, #tpu.memory_space<vmem>>, %arg10: memref<8x32xf32, #tpu.memory_space<vmem>>, %arg11: memref<8x1xf32, #tpu.memory_space<vmem>>, %arg12: memref<8x128xf32, #tpu.memory_space<vmem>>) attributes {dimension_semantics = [#tpu.dimension_semantics<parallel>], iteration_bounds = array<i64: 1>, scalar_prefetch = 0 : i64, scratch_operands = 0 : i64, tpu.core_type = #tpu.core_type<tc>, window_params = [{transform_indices = @transform_0, window_bounds = array<i64: 16, 128>}, {pipeline_mode = #tpu.pipeline_mode<synchronous>, transform_indices = @transform_1, window_bounds = array<i64: 32, 16>}, {pipeline_mode = #tpu.pipeline_mode<synchronous>, transform_indices = @transform_2, window_bounds = array<i64: 32, 1>}, {pipeline_mode = #tpu.pipeline_mode<synchronous>, transform_indices = @transform_3, window_bounds = array<i64: 32, 32>}, {pipeline_mode = #tpu.pipeline_mode<synchronous>, transform_indices = @transform_4, window_bounds = array<i64: 32, 1>}, {pipeline_mode = #tpu.pipeline_mode<synchronous>, transform_indices = @transform_5, window_bounds = array<i64: 32, 32>}, {pipeline_mode = #tpu.pipeline_mode<synchronous>, transform_indices = @transform_6, window_bounds = array<i64: 32, 1>}, {pipeline_mode = #tpu.pipeline_mode<synchronous>, transform_indices = @transform_7, window_bounds = array<i64: 32, 32>}, {pipeline_mode = #tpu.pipeline_mode<synchronous>, transform_indices = @transform_8, window_bounds = array<i64: 32, 1>}, {pipeline_mode = #tpu.pipeline_mode<synchronous>, transform_indices = @transform_9, window_bounds = array<i64: 8, 32>}, {pipeline_mode = #tpu.pipeline_mode<synchronous>, transform_indices = @transform_10, window_bounds = array<i64: 8, 1>}, {transform_indices = @transform_11, window_bounds = array<i64: 8, 128>}]} {
    %c0 = arith.constant 0 : index
    %c0_0 = arith.constant 0 : index
    %0 = vector.load %arg2[%c0, %c0_0] : memref<32x16xf32, #tpu.memory_space<vmem>>, vector<32x16xf32>
    %c0_1 = arith.constant 0 : index
    %c0_2 = arith.constant 0 : index
    %1 = vector.load %arg1[%c0_1, %c0_2] : memref<16x128xf32, #tpu.memory_space<vmem>>, vector<16x128xf32>
    %cst = arith.constant dense<0.000000e+00> : vector<32x128xf32>
    %2 = tpu.matmul %0, %1, %cst {dimension_numbers = #tpu.dot_dimension_numbers<[1], [0], [0], [1], [0, 0, 1, 1], [], []>} : vector<32x16xf32>, vector<16x128xf32>, vector<32x128xf32> -> vector<32x128xf32>
    %c0_3 = arith.constant 0 : index
    %c0_4 = arith.constant 0 : index
    %3 = vector.load %arg3[%c0_3, %c0_4] : memref<32x1xf32, #tpu.memory_space<vmem>>, vector<32x1xf32>
    %4 = vector.broadcast %3 : vector<32x1xf32> to vector<32x128xf32>
    %5 = arith.addf %2, %4 : vector<32x128xf32>
    %cst_5 = arith.constant 0.000000e+00 : f32
    %6 = vector.broadcast %cst_5 : f32 to vector<32x128xf32>
    %7 = arith.maximumf %5, %6 : vector<32x128xf32>
    %c0_6 = arith.constant 0 : index
    %c0_7 = arith.constant 0 : index
    %8 = vector.load %arg4[%c0_6, %c0_7] : memref<32x32xf32, #tpu.memory_space<vmem>>, vector<32x32xf32>
    %cst_8 = arith.constant dense<0.000000e+00> : vector<32x128xf32>
    %9 = tpu.matmul %8, %7, %cst_8 {dimension_numbers = #tpu.dot_dimension_numbers<[1], [0], [0], [1], [0, 0, 1, 1], [], []>} : vector<32x32xf32>, vector<32x128xf32>, vector<32x128xf32> -> vector<32x128xf32>
    %c0_9 = arith.constant 0 : index
    %c0_10 = arith.constant 0 : index
    %10 = vector.load %arg5[%c0_9, %c0_10] : memref<32x1xf32, #tpu.memory_space<vmem>>, vector<32x1xf32>
    %11 = vector.broadcast %10 : vector<32x1xf32> to vector<32x128xf32>
    %12 = arith.addf %9, %11 : vector<32x128xf32>
    %cst_11 = arith.constant 0.000000e+00 : f32
    %13 = vector.broadcast %cst_11 : f32 to vector<32x128xf32>
    %14 = arith.maximumf %12, %13 : vector<32x128xf32>
    %c0_12 = arith.constant 0 : index
    %c0_13 = arith.constant 0 : index
    %15 = vector.load %arg6[%c0_12, %c0_13] : memref<32x32xf32, #tpu.memory_space<vmem>>, vector<32x32xf32>
    %cst_14 = arith.constant dense<0.000000e+00> : vector<32x128xf32>
    %16 = tpu.matmul %15, %14, %cst_14 {dimension_numbers = #tpu.dot_dimension_numbers<[1], [0], [0], [1], [0, 0, 1, 1], [], []>} : vector<32x32xf32>, vector<32x128xf32>, vector<32x128xf32> -> vector<32x128xf32>
    %c0_15 = arith.constant 0 : index
    %c0_16 = arith.constant 0 : index
    %17 = vector.load %arg7[%c0_15, %c0_16] : memref<32x1xf32, #tpu.memory_space<vmem>>, vector<32x1xf32>
    %18 = vector.broadcast %17 : vector<32x1xf32> to vector<32x128xf32>
    %19 = arith.addf %16, %18 : vector<32x128xf32>
    %cst_17 = arith.constant 0.000000e+00 : f32
    %20 = vector.broadcast %cst_17 : f32 to vector<32x128xf32>
    %21 = arith.maximumf %19, %20 : vector<32x128xf32>
    %c0_18 = arith.constant 0 : index
    %c0_19 = arith.constant 0 : index
    %22 = vector.load %arg8[%c0_18, %c0_19] : memref<32x32xf32, #tpu.memory_space<vmem>>, vector<32x32xf32>
    %cst_20 = arith.constant dense<0.000000e+00> : vector<32x128xf32>
    %23 = tpu.matmul %22, %21, %cst_20 {dimension_numbers = #tpu.dot_dimension_numbers<[1], [0], [0], [1], [0, 0, 1, 1], [], []>} : vector<32x32xf32>, vector<32x128xf32>, vector<32x128xf32> -> vector<32x128xf32>
    %c0_21 = arith.constant 0 : index
    %c0_22 = arith.constant 0 : index
    %24 = vector.load %arg9[%c0_21, %c0_22] : memref<32x1xf32, #tpu.memory_space<vmem>>, vector<32x1xf32>
    %25 = vector.broadcast %24 : vector<32x1xf32> to vector<32x128xf32>
    %26 = arith.addf %23, %25 : vector<32x128xf32>
    %cst_23 = arith.constant 0.000000e+00 : f32
    %27 = vector.broadcast %cst_23 : f32 to vector<32x128xf32>
    %28 = arith.maximumf %26, %27 : vector<32x128xf32>
    %c0_24 = arith.constant 0 : index
    %c0_25 = arith.constant 0 : index
    %29 = vector.load %arg10[%c0_24, %c0_25] : memref<8x32xf32, #tpu.memory_space<vmem>>, vector<8x32xf32>
    %cst_26 = arith.constant dense<0.000000e+00> : vector<8x128xf32>
    %30 = tpu.matmul %29, %28, %cst_26 {dimension_numbers = #tpu.dot_dimension_numbers<[1], [0], [0], [1], [0, 0, 1, 1], [], []>} : vector<8x32xf32>, vector<32x128xf32>, vector<8x128xf32> -> vector<8x128xf32>
    %c0_27 = arith.constant 0 : index
    %c0_28 = arith.constant 0 : index
    %31 = vector.load %arg11[%c0_27, %c0_28] : memref<8x1xf32, #tpu.memory_space<vmem>>, vector<8x1xf32>
    %32 = vector.broadcast %31 : vector<8x1xf32> to vector<8x128xf32>
    %33 = arith.addf %30, %32 : vector<8x128xf32>
    %c0_29 = arith.constant 0 : index
    %c0_30 = arith.constant 0 : index
    %34 = vector.load %arg12[%c0_29, %c0_30] : memref<8x128xf32, #tpu.memory_space<vmem>>, vector<8x128xf32>
    tpu.vector_store %arg12[%c0_29, %c0_30], %33 {strides = array<i32>} : memref<8x128xf32, #tpu.memory_space<vmem>>, vector<8x128xf32>,
    return
  }
  func.func @transform_0(%arg0: i32) -> (i32, i32) {
    %c0_i32 = arith.constant 0 : i32
    %c0_i32_0 = arith.constant 0 : i32
    return %c0_i32, %arg0 : i32, i32
  }
  func.func @transform_1(%arg0: i32) -> (i32, i32) {
    %c0_i32 = arith.constant 0 : i32
    %c0_i32_0 = arith.constant 0 : i32
    %c0_i32_1 = arith.constant 0 : i32
    return %c0_i32, %c0_i32_0 : i32, i32
  }
  func.func @transform_2(%arg0: i32) -> (i32, i32) {
    %c0_i32 = arith.constant 0 : i32
    %c0_i32_0 = arith.constant 0 : i32
    %c0_i32_1 = arith.constant 0 : i32
    return %c0_i32, %c0_i32_0 : i32, i32
  }
  func.func @transform_3(%arg0: i32) -> (i32, i32) {
    %c0_i32 = arith.constant 0 : i32
    %c0_i32_0 = arith.constant 0 : i32
    %c0_i32_1 = arith.constant 0 : i32
    return %c0_i32, %c0_i32_0 : i32, i32
  }
  func.func @transform_4(%arg0: i32) -> (i32, i32) {
    %c0_i32 = arith.constant 0 : i32
    %c0_i32_0 = arith.constant 0 : i32
    %c0_i32_1 = arith.constant 0 : i32
    return %c0_i32, %c0_i32_0 : i32, i32
  }
  func.func @transform_5(%arg0: i32) -> (i32, i32) {
    %c0_i32 = arith.constant 0 : i32
    %c0_i32_0 = arith.constant 0 : i32
    %c0_i32_1 = arith.constant 0 : i32
    return %c0_i32, %c0_i32_0 : i32, i32
  }
  func.func @transform_6(%arg0: i32) -> (i32, i32) {
    %c0_i32 = arith.constant 0 : i32
    %c0_i32_0 = arith.constant 0 : i32
    %c0_i32_1 = arith.constant 0 : i32
    return %c0_i32, %c0_i32_0 : i32, i32
  }
  func.func @transform_7(%arg0: i32) -> (i32, i32) {
    %c0_i32 = arith.constant 0 : i32
    %c0_i32_0 = arith.constant 0 : i32
    %c0_i32_1 = arith.constant 0 : i32
    return %c0_i32, %c0_i32_0 : i32, i32
  }
  func.func @transform_8(%arg0: i32) -> (i32, i32) {
    %c0_i32 = arith.constant 0 : i32
    %c0_i32_0 = arith.constant 0 : i32
    %c0_i32_1 = arith.constant 0 : i32
    return %c0_i32, %c0_i32_0 : i32, i32
  }
  func.func @transform_9(%arg0: i32) -> (i32, i32) {
    %c0_i32 = arith.constant 0 : i32
    %c0_i32_0 = arith.constant 0 : i32
    %c0_i32_1 = arith.constant 0 : i32
    return %c0_i32, %c0_i32_0 : i32, i32
  }
  func.func @transform_10(%arg0: i32) -> (i32, i32) {
    %c0_i32 = arith.constant 0 : i32
    %c0_i32_0 = arith.constant 0 : i32
    %c0_i32_1 = arith.constant 0 : i32
    return %c0_i32, %c0_i32_0 : i32, i32
  }
  func.func @transform_11(%arg0: i32) -> (i32, i32) {
    %c0_i32 = arith.constant 0 : i32
    %c0_i32_0 = arith.constant 0 : i32
    return %c0_i32, %arg0 : i32, i32
  }
}

</mosaic_0001>

<llo_original>
// kernel: tpu_custom_call.1
$region0: #{tpu_custom_call.1}
  #allocation0 [shape = 'u32[]', space=smem, size = 0x4, offset = 0x4, fixed_abs, tag = 'smem constant byte address 0x4 - core index']
  #allocation1 [shape = 'u32[72,128]{1,0:T(1,128)}', space=vmem, size = 0x9000, scoped, tag = 'internal scratch']
  %s0 = inlined_call_operand.vmem [shape: f32[16,128], index: 0, kind: input, shape index: {}]
  %s1 = inlined_call_operand.vmem [shape: f32[32,16], index: 1, kind: input, shape index: {}]
  %s2 = inlined_call_operand.vmem [shape: f32[32,1], index: 2, kind: input, shape index: {}]
  %s3 = inlined_call_operand.vmem [shape: f32[32,32], index: 3, kind: input, shape index: {}]
  %s4 = inlined_call_operand.vmem [shape: f32[32,1], index: 4, kind: input, shape index: {}]
  %s5 = inlined_call_operand.vmem [shape: f32[32,32], index: 5, kind: input, shape index: {}]
  %s6 = inlined_call_operand.vmem [shape: f32[32,1], index: 6, kind: input, shape index: {}]
  %s7 = inlined_call_operand.vmem [shape: f32[32,32], index: 7, kind: input, shape index: {}]
  %s8 = inlined_call_operand.vmem [shape: f32[32,1], index: 8, kind: input, shape index: {}]
  %s9 = inlined_call_operand.vmem [shape: f32[8,32], index: 9, kind: input, shape index: {}]
  %s10 = inlined_call_operand.vmem [shape: f32[8,1], index: 10, kind: input, shape index: {}]
  %s11 = inlined_call_operand.hbm [shape: f32[8,128], index: 11, kind: output, shape index: {}]
  %s12 = sld [smem:[#allocation0]]
  $region54: #{tpu_custom_call.1} parent=0
    _
  %s14 = ssub.s32 1, %s12
  %s15 = scalar_select 0, %s14, %s12
  $region1: #{tpu_custom_call.1} parent=0
    #allocation2 [shape = 'u8[4096]{0}', space=vmem, size = 0x1000, scoped, tag = 'output window, operand 0, single buffered']
    #allocation3 [shape = 's32[1]{0}', space=sflag, size = 0x4, scoped, tag = 'scoped memory for tpu_custom_call.1']
    %16 = vsyncpa [#allocation3], 0
    // Predicated region
    $region2: #{tpu_custom_call.1} parent=1 // pred_check
      _
    $region3: #{tpu_custom_call.1} parent=1 // pred_check_branch
      %18 = sbr.rel (0) target = $region5
    $region4: #{tpu_custom_call.1} parent=1 // pred_region
      _
    $region5: #{tpu_custom_call.1} parent=1 // pred_fallthru
      _
    // Predicated region
    $region6: #{tpu_custom_call.1} parent=1 // pred_check
      _
    $region7: #{tpu_custom_call.1} parent=1 // pred_check_branch
      %20 = sbr.rel (0) target = $region9
    $region8: #{tpu_custom_call.1} parent=1 // pred_region
      _
    $region9: #{tpu_custom_call.1} parent=1 // pred_fallthru
      _
    // Predicated region
    $region10: #{tpu_custom_call.1} parent=1 // pred_check
      _
    $region11: #{tpu_custom_call.1} parent=1 // pred_check_branch
      %22 = sbr.rel (0) target = $region13
    $region12: #{tpu_custom_call.1} parent=1 // pred_region
      _
    $region13: #{tpu_custom_call.1} parent=1 // pred_fallthru
      _
    // Predicated region
    $region14: #{tpu_custom_call.1} parent=1 // pred_check
      _
    $region15: #{tpu_custom_call.1} parent=1 // pred_check_branch
      %24 = sbr.rel (0) target = $region17
    $region16: #{tpu_custom_call.1} parent=1 // pred_region
      _
    $region17: #{tpu_custom_call.1} parent=1 // pred_fallthru
      _
    // Predicated region
    $region18: #{tpu_custom_call.1} parent=1 // pred_check
      _
    $region19: #{tpu_custom_call.1} parent=1 // pred_check_branch
      %26 = sbr.rel (0) target = $region21
    $region20: #{tpu_custom_call.1} parent=1 // pred_region
      _
    $region21: #{tpu_custom_call.1} parent=1 // pred_fallthru
      _
    // Predicated region
    $region22: #{tpu_custom_call.1} parent=1 // pred_check
      _
    $region23: #{tpu_custom_call.1} parent=1 // pred_check_branch
      %28 = sbr.rel (0) target = $region25
    $region24: #{tpu_custom_call.1} parent=1 // pred_region
      _
    $region25: #{tpu_custom_call.1} parent=1 // pred_fallthru
      _
    // Predicated region
    $region26: #{tpu_custom_call.1} parent=1 // pred_check
      _
    $region27: #{tpu_custom_call.1} parent=1 // pred_check_branch
      %30 = sbr.rel (0) target = $region29
    $region28: #{tpu_custom_call.1} parent=1 // pred_region
      _
    $region29: #{tpu_custom_call.1} parent=1 // pred_fallthru
      _
    // Predicated region
    $region30: #{tpu_custom_call.1} parent=1 // pred_check
      _
    $region31: #{tpu_custom_call.1} parent=1 // pred_check_branch
      %32 = sbr.rel (0) target = $region33
    $region32: #{tpu_custom_call.1} parent=1 // pred_region
      _
    $region33: #{tpu_custom_call.1} parent=1 // pred_fallthru
      _
    // Predicated region
    $region34: #{tpu_custom_call.1} parent=1 // pred_check
      _
    $region35: #{tpu_custom_call.1} parent=1 // pred_check_branch
      %34 = sbr.rel (0) target = $region37
    $region36: #{tpu_custom_call.1} parent=1 // pred_region
      _
    $region37: #{tpu_custom_call.1} parent=1 // pred_fallthru
      _
    // Predicated region
    $region38: #{tpu_custom_call.1} parent=1 // pred_check
      _
    $region39: #{tpu_custom_call.1} parent=1 // pred_check_branch
      %36 = sbr.rel (0) target = $region41
    $region40: #{tpu_custom_call.1} parent=1 // pred_region
      _
    $region41: #{tpu_custom_call.1} parent=1 // pred_fallthru
      _
    // Predicated region
    $region42: #{tpu_custom_call.1} parent=1 // pred_check
      _
    $region43: #{tpu_custom_call.1} parent=1 // pred_check_branch
      %38 = sbr.rel (0) target = $region45
    $region44: #{tpu_custom_call.1} parent=1 // pred_region
      _
    $region45: #{tpu_custom_call.1} parent=1 // pred_fallthru
      _
    %v39 = vld [vmem:[%s1] sm:$0xff]
    %v40 = vld [vmem:[%s1 + $0x8] sm:$0xff]
    %v41 = vld [vmem:[%s1 + $0x10] sm:$0xff]
    %v42 = vld [vmem:[%s1 + $0x18] sm:$0xff]
    %v43 = vld [vmem:[%s0] sm:$0xff]
    %v44 = vld [vmem:[%s0 + $0x8] sm:$0xff]
    %v45 = vld [vmem:[%s2] sm:$0xff]
    %v46 = vld [vmem:[%s2 + $0x8] sm:$0xff]
    %v47 = vld [vmem:[%s2 + $0x10] sm:$0xff]
    %v48 = vld [vmem:[%s2 + $0x18] sm:$0xff]
    %50 = vset.pattern.permute.xlu0 0
    %51 = vperm.xlu0 %50, %v45
    %v52 = vpop.permute.xlu0 %51
    %55 = vset.pattern.permute.xlu0 0
    %56 = vperm.xlu0 %55, %v46
    %v57 = vpop.permute.xlu0 %56
    %60 = vset.pattern.permute.xlu0 0
    %61 = vperm.xlu0 %60, %v47
    %v62 = vpop.permute.xlu0 %61
    %65 = vset.pattern.permute.xlu0 0
    %66 = vperm.xlu0 %65, %v48
    %v67 = vpop.permute.xlu0 %66
    %vm69 = vcmask 130048
    %v71 = vsel %vm69, %v39, 0
    %v74 = vsel %vm69, %v40, 0
    %v77 = vsel %vm69, %v41, 0
    %v80 = vsel %vm69, %v42, 0
    %82 = vmatpush.msra.mxu0 0.0
    %83 = vmatpush.msra.mxu0 0.0
    %84 = vmatpush.msra.mxu0 0.0
    %85 = vmatpush.msra.mxu0 0.0
    %86 = vmatpush.msra.mxu0 0.0
    %87 = vmatpush.msra.mxu0 0.0
    %88 = vmatpush.msra.mxu0 0.0
    %89 = vmatpush.msra.mxu0 0.0
    %90 = vmatpush.msra.mxu0 0.0
    %91 = vmatpush.msra.mxu0 0.0
    %92 = vmatpush.msra.mxu0 0.0
    %93 = vmatpush.msra.mxu0 0.0
    %94 = vmatpush.msra.mxu0 0.0
    %95 = vmatpush.msra.mxu0 0.0
    %96 = vmatpush.msra.mxu0 %v44
    %97 = vmatpush.msra.mxu0 %v43
    %98 = vmatmul.f32.gmra.mxu0 %v71
    %v99 = vpop.f32.mrf.mxu0
    %v100 = vadd.f32 %v52, %v99
    %101 = vmatmul.f32.gmra.mxu0 %v74
    %v102 = vpop.f32.mrf.mxu0
    %v103 = vadd.f32 %v57, %v102
    %104 = vmatmul.f32.gmra.mxu0 %v77
    %v105 = vpop.f32.mrf.mxu0
    %v106 = vadd.f32 %v62, %v105
    %107 = vmatmul.f32.gmra.mxu0 %v80
    %v108 = vpop.f32.mrf.mxu0
    %v109 = vadd.f32 %v67, %v108
    %110 = vdwg.mxu0
    %v111 = vmax.f32 %v100, 0.0
    %v112 = vmax.f32 %v103, 0.0
    %v113 = vmax.f32 %v106, 0.0
    %v114 = vmax.f32 %v109, 0.0
    %v115 = vld [vmem:[%s3] sm:$0xff]
    %v116 = vld [vmem:[%s3 + $0x8] sm:$0xff]
    %v117 = vld [vmem:[%s3 + $0x10] sm:$0xff]
    %v118 = vld [vmem:[%s3 + $0x18] sm:$0xff]
    %v119 = vld [vmem:[%s4] sm:$0xff]
    %v120 = vld [vmem:[%s4 + $0x8] sm:$0xff]
    %v121 = vld [vmem:[%s4 + $0x10] sm:$0xff]
    %v122 = vld [vmem:[%s4 + $0x18] sm:$0xff]
    %124 = vset.pattern.permute.xlu0 0
    %125 = vperm.xlu0 %124, %v119
    %v126 = vpop.permute.xlu0 %125
    %129 = vset.pattern.permute.xlu0 0
    %130 = vperm.xlu0 %129, %v120
    %v131 = vpop.permute.xlu0 %130
    %134 = vset.pattern.permute.xlu0 0
    %135 = vperm.xlu0 %134, %v121
    %v136 = vpop.permute.xlu0 %135
    %139 = vset.pattern.permute.xlu0 0
    %140 = vperm.xlu0 %139, %v122
    %v141 = vpop.permute.xlu0 %140
    %vm143 = vcmask 261120
    %v145 = vsel %vm143, %v115, 0
    %v148 = vsel %vm143, %v116, 0
    %v151 = vsel %vm143, %v117, 0
    %v154 = vsel %vm143, %v118, 0
    %156 = vmatpush.msra.mxu0 0.0
    %157 = vmatpush.msra.mxu0 0.0
    %158 = vmatpush.msra.mxu0 0.0
    %159 = vmatpush.msra.mxu0 0.0
    %160 = vmatpush.msra.mxu0 0.0
    %161 = vmatpush.msra.mxu0 0.0
    %162 = vmatpush.msra.mxu0 0.0
    %163 = vmatpush.msra.mxu0 0.0
    %164 = vmatpush.msra.mxu0 0.0
    %165 = vmatpush.msra.mxu0 0.0
    %166 = vmatpush.msra.mxu0 0.0
    %167 = vmatpush.msra.mxu0 0.0
    %168 = vmatpush.msra.mxu0 %v114
    %169 = vmatpush.msra.mxu0 %v113
    %170 = vmatpush.msra.mxu0 %v112
    %171 = vmatpush.msra.mxu0 %v111
    %172 = vmatmul.f32.gmra.mxu0 %v145
    %v173 = vpop.f32.mrf.mxu0
    %v174 = vadd.f32 %v126, %v173
    %175 = vmatmul.f32.gmra.mxu0 %v148
    %v176 = vpop.f32.mrf.mxu0
    %v177 = vadd.f32 %v131, %v176
    %178 = vmatmul.f32.gmra.mxu0 %v151
    %v179 = vpop.f32.mrf.mxu0
    %v180 = vadd.f32 %v136, %v179
    %181 = vmatmul.f32.gmra.mxu0 %v154
    %v182 = vpop.f32.mrf.mxu0
    %v183 = vadd.f32 %v141, %v182
    %184 = vdwg.mxu0
    %v185 = vmax.f32 %v174, 0.0
    %v186 = vmax.f32 %v177, 0.0
    %v187 = vmax.f32 %v180, 0.0
    %v188 = vmax.f32 %v183, 0.0
    %v189 = vld [vmem:[%s5] sm:$0xff]
    %v190 = vld [vmem:[%s5 + $0x8] sm:$0xff]
    %v191 = vld [vmem:[%s5 + $0x10] sm:$0xff]
    %v192 = vld [vmem:[%s5 + $0x18] sm:$0xff]
    %v193 = vld [vmem:[%s6] sm:$0xff]
    %v194 = vld [vmem:[%s6 + $0x8] sm:$0xff]
    %v195 = vld [vmem:[%s6 + $0x10] sm:$0xff]
    %v196 = vld [vmem:[%s6 + $0x18] sm:$0xff]
    %198 = vset.pattern.permute.xlu0 0
    %199 = vperm.xlu0 %198, %v193
    %v200 = vpop.permute.xlu0 %199
    %203 = vset.pattern.permute.xlu0 0
    %204 = vperm.xlu0 %203, %v194
    %v205 = vpop.permute.xlu0 %204
    %208 = vset.pattern.permute.xlu0 0
    %209 = vperm.xlu0 %208, %v195
    %v210 = vpop.permute.xlu0 %209
    %213 = vset.pattern.permute.xlu0 0
    %214 = vperm.xlu0 %213, %v196
    %v215 = vpop.permute.xlu0 %214
    %v218 = vsel %vm143, %v189, 0
    %v221 = vsel %vm143, %v190, 0
    %v224 = vsel %vm143, %v191, 0
    %v227 = vsel %vm143, %v192, 0
    %229 = vmatpush.msra.mxu0 0.0
    %230 = vmatpush.msra.mxu0 0.0
    %231 = vmatpush.msra.mxu0 0.0
    %232 = vmatpush.msra.mxu0 0.0
    %233 = vmatpush.msra.mxu0 0.0
    %234 = vmatpush.msra.mxu0 0.0
    %235 = vmatpush.msra.mxu0 0.0
    %236 = vmatpush.msra.mxu0 0.0
    %237 = vmatpush.msra.mxu0 0.0
    %238 = vmatpush.msra.mxu0 0.0
    %239 = vmatpush.msra.mxu0 0.0
    %240 = vmatpush.msra.mxu0 0.0
    %241 = vmatpush.msra.mxu0 %v188
    %242 = vmatpush.msra.mxu0 %v187
    %243 = vmatpush.msra.mxu0 %v186
    %244 = vmatpush.msra.mxu0 %v185
    %245 = vmatmul.f32.gmra.mxu0 %v218
    %v246 = vpop.f32.mrf.mxu0
    %v247 = vadd.f32 %v200, %v246
    %248 = vmatmul.f32.gmra.mxu0 %v221
    %v249 = vpop.f32.mrf.mxu0
    %v250 = vadd.f32 %v205, %v249
    %251 = vmatmul.f32.gmra.mxu0 %v224
    %v252 = vpop.f32.mrf.mxu0
    %v253 = vadd.f32 %v210, %v252
    %254 = vmatmul.f32.gmra.mxu0 %v227
    %v255 = vpop.f32.mrf.mxu0
    %v256 = vadd.f32 %v215, %v255
    %257 = vdwg.mxu0
    %v258 = vmax.f32 %v247, 0.0
    %v259 = vmax.f32 %v250, 0.0
    %v260 = vmax.f32 %v253, 0.0
    %v261 = vmax.f32 %v256, 0.0
    %v262 = vld [vmem:[%s7] sm:$0xff]
    %v263 = vld [vmem:[%s7 + $0x8] sm:$0xff]
    %v264 = vld [vmem:[%s7 + $0x10] sm:$0xff]
    %v265 = vld [vmem:[%s7 + $0x18] sm:$0xff]
    %v266 = vld [vmem:[%s8] sm:$0xff]
    %v267 = vld [vmem:[%s8 + $0x8] sm:$0xff]
    %v268 = vld [vmem:[%s8 + $0x10] sm:$0xff]
    %v269 = vld [vmem:[%s8 + $0x18] sm:$0xff]
    %271 = vset.pattern.permute.xlu0 0
    %272 = vperm.xlu0 %271, %v266
    %v273 = vpop.permute.xlu0 %272
    %276 = vset.pattern.permute.xlu0 0
    %277 = vperm.xlu0 %276, %v267
    %v278 = vpop.permute.xlu0 %277
    %281 = vset.pattern.permute.xlu0 0
    %282 = vperm.xlu0 %281, %v268
    %v283 = vpop.permute.xlu0 %282
    %286 = vset.pattern.permute.xlu0 0
    %287 = vperm.xlu0 %286, %v269
    %v288 = vpop.permute.xlu0 %287
    %v291 = vsel %vm143, %v262, 0
    %v294 = vsel %vm143, %v263, 0
    %v297 = vsel %vm143, %v264, 0
    %v300 = vsel %vm143, %v265, 0
    %302 = vmatpush.msra.mxu0 0.0
    %303 = vmatpush.msra.mxu0 0.0
    %304 = vmatpush.msra.mxu0 0.0
    %305 = vmatpush.msra.mxu0 0.0
    %306 = vmatpush.msra.mxu0 0.0
    %307 = vmatpush.msra.mxu0 0.0
    %308 = vmatpush.msra.mxu0 0.0
    %309 = vmatpush.msra.mxu0 0.0
    %310 = vmatpush.msra.mxu0 0.0
    %311 = vmatpush.msra.mxu0 0.0
    %312 = vmatpush.msra.mxu0 0.0
    %313 = vmatpush.msra.mxu0 0.0
    %314 = vmatpush.msra.mxu0 %v261
    %315 = vmatpush.msra.mxu0 %v260
    %316 = vmatpush.msra.mxu0 %v259
    %317 = vmatpush.msra.mxu0 %v258
    %318 = vmatmul.f32.gmra.mxu0 %v291
    %v319 = vpop.f32.mrf.mxu0
    %v320 = vadd.f32 %v273, %v319
    %321 = vmatmul.f32.gmra.mxu0 %v294
    %v322 = vpop.f32.mrf.mxu0
    %v323 = vadd.f32 %v278, %v322
    %324 = vmatmul.f32.gmra.mxu0 %v297
    %v325 = vpop.f32.mrf.mxu0
    %v326 = vadd.f32 %v283, %v325
    %327 = vmatmul.f32.gmra.mxu0 %v300
    %v328 = vpop.f32.mrf.mxu0
    %v329 = vadd.f32 %v288, %v328
    %330 = vdwg.mxu0
    %v331 = vmax.f32 %v320, 0.0
    %v332 = vmax.f32 %v323, 0.0
    %v333 = vmax.f32 %v326, 0.0
    %v334 = vmax.f32 %v329, 0.0
    %v335 = vld [vmem:[%s9] sm:$0xff]
    %v336 = vld [vmem:[%s10] sm:$0xff]
    %338 = vset.pattern.permute.xlu0 0
    %339 = vperm.xlu0 %338, %v336
    %v340 = vpop.permute.xlu0 %339
    %v343 = vsel %vm143, %v335, 0
    %345 = vmatpush.msra.mxu0 0.0
    %346 = vmatpush.msra.mxu0 0.0
    %347 = vmatpush.msra.mxu0 0.0
    %348 = vmatpush.msra.mxu0 0.0
    %349 = vmatpush.msra.mxu0 0.0
    %350 = vmatpush.msra.mxu0 0.0
    %351 = vmatpush.msra.mxu0 0.0
    %352 = vmatpush.msra.mxu0 0.0
    %353 = vmatpush.msra.mxu0 0.0
    %354 = vmatpush.msra.mxu0 0.0
    %355 = vmatpush.msra.mxu0 0.0
    %356 = vmatpush.msra.mxu0 0.0
    %357 = vmatpush.msra.mxu0 %v334
    %358 = vmatpush.msra.mxu0 %v333
    %359 = vmatpush.msra.mxu0 %v332
    %360 = vmatpush.msra.mxu0 %v331
    %361 = vmatmul.f32.gmra.mxu0 %v343
    %v362 = vpop.f32.mrf.mxu0
    %v363 = vadd.f32 %v340, %v362
    %364 = vdwg.mxu0
    %365 = vst [vmem:[#allocation2] sm:$0xff] %v363
    // Predicated region
    $region46: #{tpu_custom_call.1} parent=1 // pred_check
      _
    $region47: #{tpu_custom_call.1} parent=1 // pred_check_branch
      %367 = sbr.rel (0) target = $region49
    $region48: #{tpu_custom_call.1} parent=1 // pred_region
      %369 = vsyncadd [#allocation3], 0
      %s371 = sshll.u32 [#allocation2], 4
      %s372 = int_to_ptr.vmem [resolvable:$true] %s371
      %s373 = sshll.u32 %s11, 4
      %s374 = int_to_ptr.hbm [resolvable:$true] %s373
      %376 = dma.vmem_to_hbm [thread:$0]  %s372, 128, %s374, [#allocation3]
    $region49: #{tpu_custom_call.1} parent=1 // pred_fallthru
      _
    // Predicated region
    $region50: #{tpu_custom_call.1} parent=1 // pred_check
      _
    $region51: #{tpu_custom_call.1} parent=1 // pred_check_branch
      %378 = sbr.rel (0) target = $region53
    $region52: #{tpu_custom_call.1} parent=1 // pred_region
      %380 = dma.done [#allocation3], 128
    $region53: #{tpu_custom_call.1} parent=1 // pred_fallthru
      _
    %381 = vsyncpa [#allocation3], 1

</llo_original>
